<compile_context>
chip_gen: v7x
topology: tpu7x:2x2x1
jax: 0.10.0
libtpu: 0.0.40
codegen_flags: <defaults>
</compile_context>

<pallas_src>
import jax
import jax.numpy as jnp
from jax.experimental import pallas as pl
from jax.experimental.pallas import tpu as pltpu


def _round_up(x, m):
    return ((x + m - 1) // m) * m


def _mlp_kernel(x_ref, w1_ref, b1_ref, w2_ref, b2_ref, w3_ref, b3_ref, o_ref):
    # Fused 3-layer MLP on one row tile.  x arrives f32 from HBM and is cast
    # to bf16 here (rides otherwise-idle VPU slots; avoids a separate
    # wrapper-side cast that would re-read/re-write the input through HBM).
    x = x_ref[...].astype(jnp.bfloat16)

    h1 = jnp.dot(x, w1_ref[...], preferred_element_type=jnp.float32)
    h1 = jnp.maximum(h1 + b1_ref[...], 0.0)                            # relu(fc1)

    h2 = jnp.dot(h1.astype(jnp.bfloat16), w2_ref[...],
                 preferred_element_type=jnp.float32)
    h2 = jnp.maximum(h2 + b2_ref[...], 0.0)                            # relu(fc2)

    # Dropout: forward is evaluated in inference mode (training=False), so
    # F.dropout is the identity here.
    # TODO(synk): training-mode dropout would use pltpu.prng_seed +
    #             pltpu.prng_random_bits for the Bernoulli mask.

    out = jnp.dot(h2.astype(jnp.bfloat16), w3_ref[...],
                  preferred_element_type=jnp.float32)
    # Output lanes are padded to a multiple of 128 -> unmasked, lane-dense vst.
    o_ref[...] = jnp.tanh(out + b3_ref[...]).astype(o_ref.dtype)       # tanh(fc_flat)


def _choose_batch_tile(n):
    """Pick the row tile.

    * n <= 16:  single tiny resident block (sublane-aligned).
    * mid-size: half the (8-aligned) batch per step -> grid of exactly 2,
      even, so v7x can shard the two steps across its 2 TensorCores.
    * large:    cap at 2048 rows (multiple of 128 -> full MXU fill on
      v5e/v6e/v7x); fused f32 intermediates stay ~6 MiB, far under VMEM on
      every generation, while grid-step overhead (~0.35 us/step) is amortized
      over ~840 MFLOP per step.
    """
    if n <= 16:
        return _round_up(n, 8)
    half = _round_up((_round_up(n, 8) + 1) // 2, 8)
    return min(2048, half)


def prepare_params(params):
    """One-time parameter prep — run ONCE, not per forward call.

    Casts matmul weights to bf16 (halves weight HBM/VMEM traffic; bf16-native
    MXU path), keeps biases f32, and zero-pads fc_flat's output lanes up to a
    multiple of 128 so the kernel's output stores are lane-dense.
    Returns (prepared_params, true_out_dim).
    """
    w1, b1, w2, b2, w3, b3 = params
    out_dim = w3.shape[1]
    out_pad = _round_up(out_dim, 128)
    if out_pad != out_dim:
        w3 = jnp.pad(w3, ((0, 0), (0, out_pad - out_dim)))
        b3 = jnp.pad(b3, ((0, 0), (0, out_pad - out_dim)))
    w1, w2, w3 = (w.astype(jnp.bfloat16) for w in (w1, w2, w3))
    b1, b2, b3 = (b.astype(jnp.float32) for b in (b1, b2, b3))
    return (w1, b1, w2, b2, w3, b3), out_dim


def neigh_gen_forward(feat, prepared_params, out_dim, *, batch_tile=None):
    """Fused Gen MLP forward.

    feat:            [N, latent_dim] float32 (NOT pre-cast; cast happens in-kernel).
    prepared_params: output of prepare_params() (bf16 weights, f32 biases,
                     fc_flat padded to a lane-dense output width).
    out_dim:         true feat_shape (padding lanes are sliced off here).
    """
    w1, b1, w2, b2, w3, b3 = prepared_params
    n, latent = feat.shape
    h1_dim, h2_dim = w1.shape[1], w2.shape[1]
    out_pad = w3.shape[1]

    if batch_tile is None:
        batch_tile = _choose_batch_tile(n)
    assert batch_tile == n or batch_tile % 8 == 0, "row tile must be sublane-aligned"

    # Pad rows to a multiple of the tile (never fall back to one huge block);
    # padded rows compute garbage that is sliced off below.
    n_pad = _round_up(n, batch_tile)
    x = feat if n_pad == n else jnp.pad(feat, ((0, n_pad - n), (0, 0)))

    grid = (n_pad // batch_tile,)

    def resident(shape):
        # Weights/biases: constant index_map -> same block every grid step,
        # stays resident in VMEM (tiny: ~300 KiB bf16 total even when
        # double-buffered, so no need to shrink its pipelining).
        return pl.BlockSpec(shape, lambda i: (0, 0))

    out = pl.pallas_call(
        _mlp_kernel,
        out_shape=jax.ShapeDtypeStruct((n_pad, out_pad), feat.dtype),
        grid=grid,
        in_specs=[
            pl.BlockSpec((batch_tile, latent), lambda i: (i, 0)),   # x row tile (f32)
            resident((latent, h1_dim)), resident((1, h1_dim)),      # fc1
            resident((h1_dim, h2_dim)), resident((1, h2_dim)),      # fc2
            resident((h2_dim, out_pad)), resident((1, out_pad)),    # fc_flat (lane-padded)
        ],
        out_specs=pl.BlockSpec((batch_tile, out_pad), lambda i: (i, 0)),
        compiler_params=pltpu.CompilerParams(
            dimension_semantics=("parallel",),
            # 2048-row tile working set is ~12 MiB (h1/h2 + double-buffered
            # I/O); 32 MiB clears v5e's 16 MiB default and is within every
            # generation's physical VMEM (incl. v7x's 64 MiB).
            vmem_limit_bytes=32 * 1024 * 1024),
    )(x, w1, b1, w2, b2, w3, b3)

    if n_pad != n or out_pad != out_dim:
        out = out[:n, :out_dim]
    return out


def init_params(key, latent_dim):
    """Deterministic PyTorch-Linear-style init: U(-1/sqrt(fan_in), 1/sqrt(fan_in))."""
    dims = [(latent_dim, 256), (256, 512), (512, latent_dim)]
    params = []
    for (fan_in, fan_out) in dims:
        key, kw, kb = jax.random.split(key, 3)
        bound = 1.0 / jnp.sqrt(float(fan_in))
        w = jax.random.uniform(kw, (fan_in, fan_out), jnp.float32, -bound, bound)
        b = jax.random.uniform(kb, (1, fan_out), jnp.float32, -bound, bound)
        params += [w, b]
    return tuple(params)


if __name__ == "__main__":
    # feat_shape (== latent_dim) = 32, batch of 8 node features.
    latent_dim = 32
    batch = 8

    key = jax.random.PRNGKey(0)
    key, kx = jax.random.split(key)
    feat = jax.random.normal(kx, (batch, latent_dim), jnp.float32)

    raw_params = init_params(key, latent_dim)
    prepared, out_dim = prepare_params(raw_params)   # one-time, outside the call path

    gen_feat = neigh_gen_forward(feat, prepared, out_dim)
    gen_feat = jax.block_until_ready(gen_feat)

    # Sanity: full-f32 reference in plain JAX (kernel uses bf16 matmul operands
    # with f32 accumulation, so compare with a loosened tolerance).
    w1, b1, w2, b2, w3, b3 = raw_params
    ref = jnp.tanh(
        jnp.maximum(jnp.maximum(feat @ w1 + b1, 0.0) @ w2 + b2, 0.0) @ w3 + b3)
    assert gen_feat.shape == (batch, latent_dim)
    assert jnp.allclose(gen_feat, ref, atol=5e-2, rtol=5e-2)

    print("KERNEL_OK")
</pallas_src>

<mosaic_0001>
module attributes {stable_mosaic.version = 11 : i64} {
  func.func @_mlp_kernel(%arg0: i32, %arg1: memref<8x32xf32, #tpu.memory_space<vmem>>, %arg2: memref<32x256xbf16, #tpu.memory_space<vmem>>, %arg3: memref<1x256xf32, #tpu.memory_space<vmem>>, %arg4: memref<256x512xbf16, #tpu.memory_space<vmem>>, %arg5: memref<1x512xf32, #tpu.memory_space<vmem>>, %arg6: memref<512x128xbf16, #tpu.memory_space<vmem>>, %arg7: memref<1x128xf32, #tpu.memory_space<vmem>>, %arg8: memref<8x128xf32, #tpu.memory_space<vmem>>) attributes {dimension_semantics = [#tpu.dimension_semantics<parallel>], iteration_bounds = array<i64: 1>, scalar_prefetch = 0 : i64, scratch_operands = 0 : i64, tpu.core_type = #tpu.core_type<tc>, window_params = [{transform_indices = @transform_0, window_bounds = array<i64: 8, 32>}, {pipeline_mode = #tpu.pipeline_mode<synchronous>, transform_indices = @transform_1, window_bounds = array<i64: 32, 256>}, {pipeline_mode = #tpu.pipeline_mode<synchronous>, transform_indices = @transform_2, window_bounds = array<i64: 1, 256>}, {pipeline_mode = #tpu.pipeline_mode<synchronous>, transform_indices = @transform_3, window_bounds = array<i64: 256, 512>}, {pipeline_mode = #tpu.pipeline_mode<synchronous>, transform_indices = @transform_4, window_bounds = array<i64: 1, 512>}, {pipeline_mode = #tpu.pipeline_mode<synchronous>, transform_indices = @transform_5, window_bounds = array<i64: 512, 128>}, {pipeline_mode = #tpu.pipeline_mode<synchronous>, transform_indices = @transform_6, window_bounds = array<i64: 1, 128>}, {transform_indices = @transform_7, window_bounds = array<i64: 8, 128>}]} {
    %c0 = arith.constant 0 : index
    %c0_0 = arith.constant 0 : index
    %0 = vector.load %arg1[%c0, %c0_0] : memref<8x32xf32, #tpu.memory_space<vmem>>, vector<8x32xf32>
    %1 = arith.truncf %0 : vector<8x32xf32> to vector<8x32xbf16>
    %c0_1 = arith.constant 0 : index
    %c0_2 = arith.constant 0 : index
    %2 = vector.load %arg2[%c0_1, %c0_2] : memref<32x256xbf16, #tpu.memory_space<vmem>>, vector<32x256xbf16>
    %cst = arith.constant dense<0.000000e+00> : vector<8x256xf32>
    %3 = tpu.matmul %1, %2, %cst {dimension_numbers = #tpu.dot_dimension_numbers<[1], [0], [0], [1], [0, 0, 1, 1], [], []>} : vector<8x32xbf16>, vector<32x256xbf16>, vector<8x256xf32> -> vector<8x256xf32>
    %c0_3 = arith.constant 0 : index
    %c0_4 = arith.constant 0 : index
    %4 = vector.load %arg3[%c0_3, %c0_4] : memref<1x256xf32, #tpu.memory_space<vmem>>, vector<1x256xf32>
    %5 = vector.broadcast %4 : vector<1x256xf32> to vector<8x256xf32>
    %6 = arith.addf %3, %5 : vector<8x256xf32>
    %cst_5 = arith.constant 0.000000e+00 : f32
    %7 = vector.broadcast %cst_5 : f32 to vector<8x256xf32>
    %8 = arith.maximumf %6, %7 : vector<8x256xf32>
    %9 = arith.truncf %8 : vector<8x256xf32> to vector<8x256xbf16>
    %c0_6 = arith.constant 0 : index
    %c0_7 = arith.constant 0 : index
    %10 = vector.load %arg4[%c0_6, %c0_7] : memref<256x512xbf16, #tpu.memory_space<vmem>>, vector<256x512xbf16>
    %cst_8 = arith.constant dense<0.000000e+00> : vector<8x512xf32>
    %11 = tpu.matmul %9, %10, %cst_8 {dimension_numbers = #tpu.dot_dimension_numbers<[1], [0], [0], [1], [0, 0, 1, 1], [], []>} : vector<8x256xbf16>, vector<256x512xbf16>, vector<8x512xf32> -> vector<8x512xf32>
    %c0_9 = arith.constant 0 : index
    %c0_10 = arith.constant 0 : index
    %12 = vector.load %arg5[%c0_9, %c0_10] : memref<1x512xf32, #tpu.memory_space<vmem>>, vector<1x512xf32>
    %13 = vector.broadcast %12 : vector<1x512xf32> to vector<8x512xf32>
    %14 = arith.addf %11, %13 : vector<8x512xf32>
    %cst_11 = arith.constant 0.000000e+00 : f32
    %15 = vector.broadcast %cst_11 : f32 to vector<8x512xf32>
    %16 = arith.maximumf %14, %15 : vector<8x512xf32>
    %17 = arith.truncf %16 : vector<8x512xf32> to vector<8x512xbf16>
    %c0_12 = arith.constant 0 : index
    %c0_13 = arith.constant 0 : index
    %18 = vector.load %arg6[%c0_12, %c0_13] : memref<512x128xbf16, #tpu.memory_space<vmem>>, vector<512x128xbf16>
    %cst_14 = arith.constant dense<0.000000e+00> : vector<8x128xf32>
    %19 = tpu.matmul %17, %18, %cst_14 {dimension_numbers = #tpu.dot_dimension_numbers<[1], [0], [0], [1], [0, 0, 1, 1], [], []>} : vector<8x512xbf16>, vector<512x128xbf16>, vector<8x128xf32> -> vector<8x128xf32>
    %c0_15 = arith.constant 0 : index
    %c0_16 = arith.constant 0 : index
    %20 = vector.load %arg7[%c0_15, %c0_16] : memref<1x128xf32, #tpu.memory_space<vmem>>, vector<1x128xf32>
    %21 = vector.broadcast %20 : vector<1x128xf32> to vector<8x128xf32>
    %22 = arith.addf %19, %21 : vector<8x128xf32>
    %23 = math.tanh %22 : vector<8x128xf32>
    %c0_17 = arith.constant 0 : index
    %c0_18 = arith.constant 0 : index
    %24 = vector.load %arg8[%c0_17, %c0_18] : memref<8x128xf32, #tpu.memory_space<vmem>>, vector<8x128xf32>
    tpu.vector_store %arg8[%c0_17, %c0_18], %23 {strides = array<i32>} : memref<8x128xf32, #tpu.memory_space<vmem>>, vector<8x128xf32>,
    return
  }
  func.func @transform_0(%arg0: i32) -> (i32, i32) {
    %c0_i32 = arith.constant 0 : i32
    %c0_i32_0 = arith.constant 0 : i32
    return %arg0, %c0_i32 : i32, i32
  }
  func.func @transform_1(%arg0: i32) -> (i32, i32) {
    %c0_i32 = arith.constant 0 : i32
    %c0_i32_0 = arith.constant 0 : i32
    %c0_i32_1 = arith.constant 0 : i32
    return %c0_i32, %c0_i32_0 : i32, i32
  }
  func.func @transform_2(%arg0: i32) -> (i32, i32) {
    %c0_i32 = arith.constant 0 : i32
    %c0_i32_0 = arith.constant 0 : i32
    %c0_i32_1 = arith.constant 0 : i32
    return %c0_i32, %c0_i32_0 : i32, i32
  }
  func.func @transform_3(%arg0: i32) -> (i32, i32) {
    %c0_i32 = arith.constant 0 : i32
    %c0_i32_0 = arith.constant 0 : i32
    %c0_i32_1 = arith.constant 0 : i32
    return %c0_i32, %c0_i32_0 : i32, i32
  }
  func.func @transform_4(%arg0: i32) -> (i32, i32) {
    %c0_i32 = arith.constant 0 : i32
    %c0_i32_0 = arith.constant 0 : i32
    %c0_i32_1 = arith.constant 0 : i32
    return %c0_i32, %c0_i32_0 : i32, i32
  }
  func.func @transform_5(%arg0: i32) -> (i32, i32) {
    %c0_i32 = arith.constant 0 : i32
    %c0_i32_0 = arith.constant 0 : i32
    %c0_i32_1 = arith.constant 0 : i32
    return %c0_i32, %c0_i32_0 : i32, i32
  }
  func.func @transform_6(%arg0: i32) -> (i32, i32) {
    %c0_i32 = arith.constant 0 : i32
    %c0_i32_0 = arith.constant 0 : i32
    %c0_i32_1 = arith.constant 0 : i32
    return %c0_i32, %c0_i32_0 : i32, i32
  }
  func.func @transform_7(%arg0: i32) -> (i32, i32) {
    %c0_i32 = arith.constant 0 : i32
    %c0_i32_0 = arith.constant 0 : i32
    return %arg0, %c0_i32 : i32, i32
  }
}

</mosaic_0001>

<llo_original>
// kernel: tpu_custom_call.1
$region0: #{tpu_custom_call.1}
  #allocation0 [shape = 'u32[]', space=smem, size = 0x4, offset = 0x4, fixed_abs, tag = 'smem constant byte address 0x4 - core index']
  #allocation1 [shape = 'u32[144,128]{1,0:T(1,128)}', space=vmem, size = 0x12000, scoped, tag = 'internal scratch']
  %s0 = inlined_call_operand.hbm [shape: f32[8,32], index: 0, kind: input, shape index: {}]
  %s1 = inlined_call_operand.hbm [shape: bf16[32,256], index: 1, kind: input, shape index: {}]
  %s2 = inlined_call_operand.vmem [shape: f32[1,256], index: 2, kind: input, shape index: {}]
  %s3 = inlined_call_operand.hbm [shape: bf16[256,512], index: 3, kind: input, shape index: {}]
  %s4 = inlined_call_operand.vmem [shape: f32[1,512], index: 4, kind: input, shape index: {}]
  %s5 = inlined_call_operand.hbm [shape: bf16[512,128], index: 5, kind: input, shape index: {}]
  %s6 = inlined_call_operand.vmem [shape: f32[1,128], index: 6, kind: input, shape index: {}]
  %s7 = inlined_call_operand.hbm [shape: f32[8,128], index: 7, kind: output, shape index: {}]
  %s8 = sld [smem:[#allocation0]]
  $region54: #{tpu_custom_call.1} parent=0
    _
  %s10 = ssub.s32 1, %s8
  %s11 = scalar_select 0, %s10, %s8
  $region1: #{tpu_custom_call.1} parent=0
    #allocation2 [shape = 'u8[4096]{0}', space=vmem, size = 0x1000, scoped, tag = 'input window, operand 0, single buffered']
    #allocation3 [shape = 's32[1]{0}', space=sflag, size = 0x4, scoped, tag = 'scoped memory for tpu_custom_call.1']
    #allocation4 [shape = 's32[1]{0}', space=sflag, size = 0x4, scoped, tag = 'scoped memory for tpu_custom_call.1']
    #allocation5 [shape = 'u8[16384]{0}', space=vmem, size = 0x4000, scoped, tag = 'input window, operand 1, single buffered']
    #allocation6 [shape = 's32[1]{0}', space=sflag, size = 0x4, scoped, tag = 'scoped memory for tpu_custom_call.1']
    #allocation7 [shape = 'u8[262144]{0}', space=vmem, size = 0x40000, scoped, tag = 'input window, operand 3, single buffered']
    #allocation8 [shape = 'u8[131072]{0}', space=vmem, size = 0x20000, scoped, tag = 'input window, operand 5, single buffered']
    #allocation9 [shape = 's32[1]{0}', space=sflag, size = 0x4, scoped, tag = 'scoped memory for tpu_custom_call.1']
    #allocation10 [shape = 'u8[4096]{0}', space=vmem, size = 0x1000, scoped, tag = 'output window, operand 0, single buffered']
    %12 = vsyncpa [#allocation3], 0
    %13 = vsyncpa [#allocation6], 0
    %14 = vsyncpa [#allocation9], 0
    %15 = vsyncpa [#allocation4], 0
    // Predicated region
    $region2: #{tpu_custom_call.1} parent=1 // pred_check
      _
    $region3: #{tpu_custom_call.1} parent=1 // pred_check_branch
      %17 = sbr.rel (0) target = $region5
    $region4: #{tpu_custom_call.1} parent=1 // pred_region
      %s19 = ssub.s32 128, 128
      %20 = vsyncadd [#allocation3], %s19
      %s22 = sshll.u32 [#allocation2], 4
      %s23 = int_to_ptr.vmem [resolvable:$true] %s22
      %25 = dma.hbm_to_vmem [thread:$0]  %s0, 128, %s23, [#allocation3]
    $region5: #{tpu_custom_call.1} parent=1 // pred_fallthru
      _
    // Predicated region
    $region6: #{tpu_custom_call.1} parent=1 // pred_check
      _
    $region7: #{tpu_custom_call.1} parent=1 // pred_check_branch
      %27 = sbr.rel (0) target = $region9
    $region8: #{tpu_custom_call.1} parent=1 // pred_region
      %s29 = ssub.s32 512, 512
      %30 = vsyncadd [#allocation6], %s29
      %s31 = sshll.u32 [#allocation5], 4
      %s32 = int_to_ptr.vmem [resolvable:$true] %s31
      %37 = dma.hbm_to_vmem [thread:$0]  %s1, 512, %s32, [#allocation6], 128, 128, 8
    $region9: #{tpu_custom_call.1} parent=1 // pred_fallthru
      _
    // Predicated region
    $region10: #{tpu_custom_call.1} parent=1 // pred_check
      _
    $region11: #{tpu_custom_call.1} parent=1 // pred_check_branch
      %39 = sbr.rel (0) target = $region13
    $region12: #{tpu_custom_call.1} parent=1 // pred_region
      _
    $region13: #{tpu_custom_call.1} parent=1 // pred_fallthru
      _
    // Predicated region
    $region14: #{tpu_custom_call.1} parent=1 // pred_check
      _
    $region15: #{tpu_custom_call.1} parent=1 // pred_check_branch
      %41 = sbr.rel (0) target = $region17
    $region16: #{tpu_custom_call.1} parent=1 // pred_region
      %s43 = ssub.s32 8192, 8192
      %44 = vsyncadd [#allocation6], %s43
      %s45 = sshll.u32 [#allocation7], 4
      %s46 = int_to_ptr.vmem [resolvable:$true] %s45
      %51 = dma.hbm_to_vmem [thread:$0]  %s3, 8192, %s46, [#allocation6], 256, 256, 16
    $region17: #{tpu_custom_call.1} parent=1 // pred_fallthru
      _
    // Predicated region
    $region18: #{tpu_custom_call.1} parent=1 // pred_check
      _
    $region19: #{tpu_custom_call.1} parent=1 // pred_check_branch
      %53 = sbr.rel (0) target = $region21
    $region20: #{tpu_custom_call.1} parent=1 // pred_region
      _
    $region21: #{tpu_custom_call.1} parent=1 // pred_fallthru
      _
    // Predicated region
    $region22: #{tpu_custom_call.1} parent=1 // pred_check
      _
    $region23: #{tpu_custom_call.1} parent=1 // pred_check_branch
      %55 = sbr.rel (0) target = $region25
    $region24: #{tpu_custom_call.1} parent=1 // pred_region
      %s57 = ssub.s32 4096, 4096
      %58 = vsyncadd [#allocation9], %s57
      %s59 = sshll.u32 [#allocation8], 4
      %s60 = int_to_ptr.vmem [resolvable:$true] %s59
      %65 = dma.hbm_to_vmem [thread:$0]  %s5, 4096, %s60, [#allocation9], 64, 64, 4
    $region25: #{tpu_custom_call.1} parent=1 // pred_fallthru
      _
    // Predicated region
    $region26: #{tpu_custom_call.1} parent=1 // pred_check
      _
    $region27: #{tpu_custom_call.1} parent=1 // pred_check_branch
      %67 = sbr.rel (0) target = $region29
    $region28: #{tpu_custom_call.1} parent=1 // pred_region
      _
    $region29: #{tpu_custom_call.1} parent=1 // pred_fallthru
      _
    // Predicated region
    $region30: #{tpu_custom_call.1} parent=1 // pred_check
      _
    $region31: #{tpu_custom_call.1} parent=1 // pred_check_branch
      %69 = sbr.rel (0) target = $region33
    $region32: #{tpu_custom_call.1} parent=1 // pred_region
      %70 = dma.done [#allocation3], 128
    $region33: #{tpu_custom_call.1} parent=1 // pred_fallthru
      _
    // Predicated region
    $region34: #{tpu_custom_call.1} parent=1 // pred_check
      _
    $region35: #{tpu_custom_call.1} parent=1 // pred_check_branch
      %72 = sbr.rel (0) target = $region37
    $region36: #{tpu_custom_call.1} parent=1 // pred_region
      %73 = dma.done [#allocation6], 512
    $region37: #{tpu_custom_call.1} parent=1 // pred_fallthru
      _
    // Predicated region
    $region38: #{tpu_custom_call.1} parent=1 // pred_check
      _
    $region39: #{tpu_custom_call.1} parent=1 // pred_check_branch
      %75 = sbr.rel (0) target = $region41
    $region40: #{tpu_custom_call.1} parent=1 // pred_region
      %76 = dma.done [#allocation6], 8192
    $region41: #{tpu_custom_call.1} parent=1 // pred_fallthru
      _
    // Predicated region
    $region42: #{tpu_custom_call.1} parent=1 // pred_check
      _
    $region43: #{tpu_custom_call.1} parent=1 // pred_check_branch
      %78 = sbr.rel (0) target = $region45
    $region44: #{tpu_custom_call.1} parent=1 // pred_region
      %79 = dma.done [#allocation9], 4096
    $region45: #{tpu_custom_call.1} parent=1 // pred_fallthru
      _
    %v81 = vld [vmem:[#allocation2] sm:$0xff]
    %v82 = vpack.c.bf16 %v81, %v81
    %v83 = vld [vmem:[#allocation5] sm:$0xff]
    %v84 = vld [vmem:[#allocation5 + $0x8] sm:$0xff]
    %v85 = vld [vmem:[#allocation5 + $0x10] sm:$0xff]
    %v86 = vld [vmem:[#allocation5 + $0x18] sm:$0xff]
    %v87 = vld [vmem:[%s2] sm:$0x3]
    %v89 = vlaneseq
    %v90 = vshrl.u32 %v89, 7
    %v91 = vsub.s32 0, %v90
    %v92 = vrot.slane %v87, %v91
    %v93 = vlaneseq
    %v94 = vshrl.u32 %v93, 7
    %v95 = vsub.s32 1, %v94
    %v96 = vrot.slane %v87, %v95
    %v103 = vunpack.c.l.b16 %v83
    %v104 = vunpack.c.h.b16 %v83
    %v105 = vunpack.c.l.b16 %v84
    %v106 = vunpack.c.h.b16 %v84
    %v107 = vunpack.c.l.b16 %v85
    %v108 = vunpack.c.h.b16 %v85
    %v109 = vunpack.c.l.b16 %v86
    %v110 = vunpack.c.h.b16 %v86
    %v111 = vpack.c.b16 %v105, %v103
    %v112 = vpack.c.b16 %v106, %v104
    %v113 = vpack.c.b16 %v109, %v107
    %v114 = vpack.c.b16 %v110, %v108
    %vm119 = vcmask 261120
    %v121 = vsel %vm119, %v82, 0
    %123 = vmatprep.subr.bf16.mxu0 %v112
    %124 = vmatpush1.bf16.msra.mxu0 %v111
    %125 = vmatprep.subr.bf16.mxu0 %v114
    %126 = vmatpush1.bf16.msra.mxu0 %v113
    %127 = vmatprep.subr.bf16.mxu0 0
    %128 = vmatpush1.bf16.msra.mxu0 0
    %129 = vmatprep.subr.bf16.mxu0 0
    %130 = vmatpush1.bf16.msra.mxu0 0
    %131 = vmatprep.subr.bf16.mxu0 0
    %132 = vmatpush1.bf16.msra.mxu0 0
    %133 = vmatprep.subr.bf16.mxu0 0
    %134 = vmatpush1.bf16.msra.mxu0 0
    %135 = vmatprep.subr.bf16.mxu0 0
    %136 = vmatpush1.bf16.msra.mxu0 0
    %137 = vmatprep.subr.bf16.mxu0 0
    %138 = vmatpush1.bf16.msra.mxu0 0
    %139 = vmatprep.subr.bf16.mxu0 0
    %140 = vmatpush1.bf16.msra.mxu0 0
    %141 = vmatprep.subr.bf16.mxu0 0
    %142 = vmatpush1.bf16.msra.mxu0 0
    %143 = vmatprep.subr.bf16.mxu0 0
    %144 = vmatpush1.bf16.msra.mxu0 0
    %145 = vmatprep.subr.bf16.mxu0 0
    %146 = vmatpush1.bf16.msra.mxu0 0
    %147 = vmatprep.subr.bf16.mxu0 0
    %148 = vmatpush1.bf16.msra.mxu0 0
    %149 = vmatprep.subr.bf16.mxu0 0
    %150 = vmatpush1.bf16.msra.mxu0 0
    %151 = vmatprep.subr.bf16.mxu0 0
    %152 = vmatpush1.bf16.msra.mxu0 0
    %153 = vmatprep.subr.bf16.mxu0 0
    %154 = vmatpush1.bf16.msra.mxu0 0
    %155 = vmatprep.mubr.bf16.mxu0 0
    %156 = vmatmul.mubr.bf16.gmra.mrb[0].mxu0 %v121
    %v157 = vpop.f32.mrb[0].mxu0
    %v158 = vadd.f32 %v92, %v157
    %v159 = vpop.f32.mrb[0].mxu0
    %v160 = vadd.f32 %v96, %v159
    %v161 = vpop.f32.mrb[0].mxu0
    %v162 = vpop.f32.mrb[0].mxu0
    %163 = vdwg.mxu0
    %v164 = vmax.f32 %v158, 0.0
    %v165 = vmax.f32 %v160, 0.0
    %v166 = vpack.c.bf16 %v164, %v164
    %v167 = vpack.c.bf16 %v165, %v165
    %v168 = vld [vmem:[#allocation7] sm:$0xff]
    %v169 = vld [vmem:[#allocation7 + $0x8] sm:$0xff]
    %v170 = vld [vmem:[#allocation7 + $0x10] sm:$0xff]
    %v171 = vld [vmem:[#allocation7 + $0x18] sm:$0xff]
    %v172 = vld [vmem:[#allocation7 + $0x20] sm:$0xff]
    %v173 = vld [vmem:[#allocation7 + $0x28] sm:$0xff]
    %v174 = vld [vmem:[#allocation7 + $0x30] sm:$0xff]
    %v175 = vld [vmem:[#allocation7 + $0x38] sm:$0xff]
    %v176 = vld [vmem:[#allocation7 + $0x40] sm:$0xff]
    %v177 = vld [vmem:[#allocation7 + $0x48] sm:$0xff]
    %v178 = vld [vmem:[#allocation7 + $0x50] sm:$0xff]
    %v179 = vld [vmem:[#allocation7 + $0x58] sm:$0xff]
    %v180 = vld [vmem:[#allocation7 + $0x60] sm:$0xff]
    %v181 = vld [vmem:[#allocation7 + $0x68] sm:$0xff]
    %v182 = vld [vmem:[#allocation7 + $0x70] sm:$0xff]
    %v183 = vld [vmem:[#allocation7 + $0x78] sm:$0xff]
    %v184 = vld [vmem:[#allocation7 + $0x80] sm:$0xff]
    %v185 = vld [vmem:[#allocation7 + $0x88] sm:$0xff]
    %v186 = vld [vmem:[#allocation7 + $0x90] sm:$0xff]
    %v187 = vld [vmem:[#allocation7 + $0x98] sm:$0xff]
    %v188 = vld [vmem:[#allocation7 + $0xa0] sm:$0xff]
    %v189 = vld [vmem:[#allocation7 + $0xa8] sm:$0xff]
    %v190 = vld [vmem:[#allocation7 + $0xb0] sm:$0xff]
    %v191 = vld [vmem:[#allocation7 + $0xb8] sm:$0xff]
    %v192 = vld [vmem:[#allocation7 + $0xc0] sm:$0xff]
    %v193 = vld [vmem:[#allocation7 + $0xc8] sm:$0xff]
    %v194 = vld [vmem:[#allocation7 + $0xd0] sm:$0xff]
    %v195 = vld [vmem:[#allocation7 + $0xd8] sm:$0xff]
    %v196 = vld [vmem:[#allocation7 + $0xe0] sm:$0xff]
    %v197 = vld [vmem:[#allocation7 + $0xe8] sm:$0xff]
    %v198 = vld [vmem:[#allocation7 + $0xf0] sm:$0xff]
    %v199 = vld [vmem:[#allocation7 + $0xf8] sm:$0xff]
    %v200 = vld [vmem:[#allocation7 + $0x100] sm:$0xff]
    %v201 = vld [vmem:[#allocation7 + $0x108] sm:$0xff]
    %v202 = vld [vmem:[#allocation7 + $0x110] sm:$0xff]
    %v203 = vld [vmem:[#allocation7 + $0x118] sm:$0xff]
    %v204 = vld [vmem:[#allocation7 + $0x120] sm:$0xff]
    %v205 = vld [vmem:[#allocation7 + $0x128] sm:$0xff]
    %v206 = vld [vmem:[#allocation7 + $0x130] sm:$0xff]
    %v207 = vld [vmem:[#allocation7 + $0x138] sm:$0xff]
    %v208 = vld [vmem:[#allocation7 + $0x140] sm:$0xff]
    %v209 = vld [vmem:[#allocation7 + $0x148] sm:$0xff]
    %v210 = vld [vmem:[#allocation7 + $0x150] sm:$0xff]
    %v211 = vld [vmem:[#allocation7 + $0x158] sm:$0xff]
    %v212 = vld [vmem:[#allocation7 + $0x160] sm:$0xff]
    %v213 = vld [vmem:[#allocation7 + $0x168] sm:$0xff]
    %v214 = vld [vmem:[#allocation7 + $0x170] sm:$0xff]
    %v215 = vld [vmem:[#allocation7 + $0x178] sm:$0xff]
    %v216 = vld [vmem:[#allocation7 + $0x180] sm:$0xff]
    %v217 = vld [vmem:[#allocation7 + $0x188] sm:$0xff]
    %v218 = vld [vmem:[#allocation7 + $0x190] sm:$0xff]
    %v219 = vld [vmem:[#allocation7 + $0x198] sm:$0xff]
    %v220 = vld [vmem:[#allocation7 + $0x1a0] sm:$0xff]
    %v221 = vld [vmem:[#allocation7 + $0x1a8] sm:$0xff]
    %v222 = vld [vmem:[#allocation7 + $0x1b0] sm:$0xff]
    %v223 = vld [vmem:[#allocation7 + $0x1b8] sm:$0xff]
    %v224 = vld [vmem:[#allocation7 + $0x1c0] sm:$0xff]
    %v225 = vld [vmem:[#allocation7 + $0x1c8] sm:$0xff]
    %v226 = vld [vmem:[#allocation7 + $0x1d0] sm:$0xff]
    %v227 = vld [vmem:[#allocation7 + $0x1d8] sm:$0xff]
    %v228 = vld [vmem:[#allocation7 + $0x1e0] sm:$0xff]
    %v229 = vld [vmem:[#allocation7 + $0x1e8] sm:$0xff]
    %v230 = vld [vmem:[#allocation7 + $0x1f0] sm:$0xff]
    %v231 = vld [vmem:[#allocation7 + $0x1f8] sm:$0xff]
    %v232 = vld [vmem:[%s4] sm:$0xf]
    %v234 = vlaneseq
    %v235 = vshrl.u32 %v234, 7
    %v236 = vsub.s32 0, %v235
    %v237 = vrot.slane %v232, %v236
    %v238 = vlaneseq
    %v239 = vshrl.u32 %v238, 7
    %v240 = vsub.s32 1, %v239
    %v241 = vrot.slane %v232, %v240
    %v242 = vlaneseq
    %v243 = vshrl.u32 %v242, 7
    %v244 = vsub.s32 2, %v243
    %v245 = vrot.slane %v232, %v244
    %v246 = vlaneseq
    %v247 = vshrl.u32 %v246, 7
    %v248 = vsub.s32 3, %v247
    %v249 = vrot.slane %v232, %v248
    %v318 = vunpack.c.l.b16 %v168
    %v319 = vunpack.c.h.b16 %v168
    %v320 = vunpack.c.l.b16 %v169
    %v321 = vunpack.c.h.b16 %v169
    %v322 = vunpack.c.l.b16 %v170
    %v323 = vunpack.c.h.b16 %v170
    %v324 = vunpack.c.l.b16 %v171
    %v325 = vunpack.c.h.b16 %v171
    %v326 = vunpack.c.l.b16 %v172
    %v327 = vunpack.c.h.b16 %v172
    %v328 = vunpack.c.l.b16 %v173
    %v329 = vunpack.c.h.b16 %v173
    %v330 = vunpack.c.l.b16 %v174
    %v331 = vunpack.c.h.b16 %v174
    %v332 = vunpack.c.l.b16 %v175
    %v333 = vunpack.c.h.b16 %v175
    %v334 = vunpack.c.l.b16 %v176
    %v335 = vunpack.c.h.b16 %v176
    %v336 = vunpack.c.l.b16 %v177
    %v337 = vunpack.c.h.b16 %v177
    %v338 = vunpack.c.l.b16 %v178
    %v339 = vunpack.c.h.b16 %v178
    %v340 = vunpack.c.l.b16 %v179
    %v341 = vunpack.c.h.b16 %v179
    %v342 = vunpack.c.l.b16 %v180
    %v343 = vunpack.c.h.b16 %v180
    %v344 = vunpack.c.l.b16 %v181
    %v345 = vunpack.c.h.b16 %v181
    %v346 = vunpack.c.l.b16 %v182
    %v347 = vunpack.c.h.b16 %v182
    %v348 = vunpack.c.l.b16 %v183
    %v349 = vunpack.c.h.b16 %v183
    %v350 = vunpack.c.l.b16 %v184
    %v351 = vunpack.c.h.b16 %v184
    %v352 = vunpack.c.l.b16 %v185
    %v353 = vunpack.c.h.b16 %v185
    %v354 = vunpack.c.l.b16 %v186
    %v355 = vunpack.c.h.b16 %v186
    %v356 = vunpack.c.l.b16 %v187
    %v357 = vunpack.c.h.b16 %v187
    %v358 = vunpack.c.l.b16 %v188
    %v359 = vunpack.c.h.b16 %v188
    %v360 = vunpack.c.l.b16 %v189
    %v361 = vunpack.c.h.b16 %v189
    %v362 = vunpack.c.l.b16 %v190
    %v363 = vunpack.c.h.b16 %v190
    %v364 = vunpack.c.l.b16 %v191
    %v365 = vunpack.c.h.b16 %v191
    %v366 = vunpack.c.l.b16 %v192
    %v367 = vunpack.c.h.b16 %v192
    %v368 = vunpack.c.l.b16 %v193
    %v369 = vunpack.c.h.b16 %v193
    %v370 = vunpack.c.l.b16 %v194
    %v371 = vunpack.c.h.b16 %v194
    %v372 = vunpack.c.l.b16 %v195
    %v373 = vunpack.c.h.b16 %v195
    %v374 = vunpack.c.l.b16 %v196
    %v375 = vunpack.c.h.b16 %v196
    %v376 = vunpack.c.l.b16 %v197
    %v377 = vunpack.c.h.b16 %v197
    %v378 = vunpack.c.l.b16 %v198
    %v379 = vunpack.c.h.b16 %v198
    %v380 = vunpack.c.l.b16 %v199
    %v381 = vunpack.c.h.b16 %v199
    %v382 = vunpack.c.l.b16 %v200
    %v383 = vunpack.c.h.b16 %v200
    %v384 = vunpack.c.l.b16 %v201
    %v385 = vunpack.c.h.b16 %v201
    %v386 = vunpack.c.l.b16 %v202
    %v387 = vunpack.c.h.b16 %v202
    %v388 = vunpack.c.l.b16 %v203
    %v389 = vunpack.c.h.b16 %v203
    %v390 = vunpack.c.l.b16 %v204
    %v391 = vunpack.c.h.b16 %v204
    %v392 = vunpack.c.l.b16 %v205
    %v393 = vunpack.c.h.b16 %v205
    %v394 = vunpack.c.l.b16 %v206
    %v395 = vunpack.c.h.b16 %v206
    %v396 = vunpack.c.l.b16 %v207
    %v397 = vunpack.c.h.b16 %v207
    %v398 = vunpack.c.l.b16 %v208
    %v399 = vunpack.c.h.b16 %v208
    %v400 = vunpack.c.l.b16 %v209
    %v401 = vunpack.c.h.b16 %v209
    %v402 = vunpack.c.l.b16 %v210
    %v403 = vunpack.c.h.b16 %v210
    %v404 = vunpack.c.l.b16 %v211
    %v405 = vunpack.c.h.b16 %v211
    %v406 = vunpack.c.l.b16 %v212
    %v407 = vunpack.c.h.b16 %v212
    %v408 = vunpack.c.l.b16 %v213
    %v409 = vunpack.c.h.b16 %v213
    %v410 = vunpack.c.l.b16 %v214
    %v411 = vunpack.c.h.b16 %v214
    %v412 = vunpack.c.l.b16 %v215
    %v413 = vunpack.c.h.b16 %v215
    %v414 = vunpack.c.l.b16 %v216
    %v415 = vunpack.c.h.b16 %v216
    %v416 = vunpack.c.l.b16 %v217
    %v417 = vunpack.c.h.b16 %v217
    %v418 = vunpack.c.l.b16 %v218
    %v419 = vunpack.c.h.b16 %v218
    %v420 = vunpack.c.l.b16 %v219
    %v421 = vunpack.c.h.b16 %v219
    %v422 = vunpack.c.l.b16 %v220
    %v423 = vunpack.c.h.b16 %v220
    %v424 = vunpack.c.l.b16 %v221
    %v425 = vunpack.c.h.b16 %v221
    %v426 = vunpack.c.l.b16 %v222
    %v427 = vunpack.c.h.b16 %v222
    %v428 = vunpack.c.l.b16 %v223
    %v429 = vunpack.c.h.b16 %v223
    %v430 = vunpack.c.l.b16 %v224
    %v431 = vunpack.c.h.b16 %v224
    %v432 = vunpack.c.l.b16 %v225
    %v433 = vunpack.c.h.b16 %v225
    %v434 = vunpack.c.l.b16 %v226
    %v435 = vunpack.c.h.b16 %v226
    %v436 = vunpack.c.l.b16 %v227
    %v437 = vunpack.c.h.b16 %v227
    %v438 = vunpack.c.l.b16 %v228
    %v439 = vunpack.c.h.b16 %v228
    %v440 = vunpack.c.l.b16 %v229
    %v441 = vunpack.c.h.b16 %v229
    %v442 = vunpack.c.l.b16 %v230
    %v443 = vunpack.c.h.b16 %v230
    %v444 = vunpack.c.l.b16 %v231
    %v445 = vunpack.c.h.b16 %v231
    %v446 = vpack.c.b16 %v322, %v318
    %v447 = vpack.c.b16 %v323, %v319
    %v448 = vpack.c.b16 %v324, %v320
    %v449 = vpack.c.b16 %v325, %v321
    %v450 = vpack.c.b16 %v330, %v326
    %v451 = vpack.c.b16 %v331, %v327
    %v452 = vpack.c.b16 %v332, %v328
    %v453 = vpack.c.b16 %v333, %v329
    %v454 = vpack.c.b16 %v338, %v334
    %v455 = vpack.c.b16 %v339, %v335
    %v456 = vpack.c.b16 %v340, %v336
    %v457 = vpack.c.b16 %v341, %v337
    %v458 = vpack.c.b16 %v346, %v342
    %v459 = vpack.c.b16 %v347, %v343
    %v460 = vpack.c.b16 %v348, %v344
    %v461 = vpack.c.b16 %v349, %v345
    %v462 = vpack.c.b16 %v354, %v350
    %v463 = vpack.c.b16 %v355, %v351
    %v464 = vpack.c.b16 %v356, %v352
    %v465 = vpack.c.b16 %v357, %v353
    %v466 = vpack.c.b16 %v362, %v358
    %v467 = vpack.c.b16 %v363, %v359
    %v468 = vpack.c.b16 %v364, %v360
    %v469 = vpack.c.b16 %v365, %v361
    %v470 = vpack.c.b16 %v370, %v366
    %v471 = vpack.c.b16 %v371, %v367
    %v472 = vpack.c.b16 %v372, %v368
    %v473 = vpack.c.b16 %v373, %v369
    %v474 = vpack.c.b16 %v378, %v374
    %v475 = vpack.c.b16 %v379, %v375
    %v476 = vpack.c.b16 %v380, %v376
    %v477 = vpack.c.b16 %v381, %v377
    %v478 = vpack.c.b16 %v386, %v382
    %v479 = vpack.c.b16 %v387, %v383
    %v480 = vpack.c.b16 %v388, %v384
    %v481 = vpack.c.b16 %v389, %v385
    %v482 = vpack.c.b16 %v394, %v390
    %v483 = vpack.c.b16 %v395, %v391
    %v484 = vpack.c.b16 %v396, %v392
    %v485 = vpack.c.b16 %v397, %v393
    %v486 = vpack.c.b16 %v402, %v398
    %v487 = vpack.c.b16 %v403, %v399
    %v488 = vpack.c.b16 %v404, %v400
    %v489 = vpack.c.b16 %v405, %v401
    %v490 = vpack.c.b16 %v410, %v406
    %v491 = vpack.c.b16 %v411, %v407
    %v492 = vpack.c.b16 %v412, %v408
    %v493 = vpack.c.b16 %v413, %v409
    %v494 = vpack.c.b16 %v418, %v414
    %v495 = vpack.c.b16 %v419, %v415
    %v496 = vpack.c.b16 %v420, %v416
    %v497 = vpack.c.b16 %v421, %v417
    %v498 = vpack.c.b16 %v426, %v422
    %v499 = vpack.c.b16 %v427, %v423
    %v500 = vpack.c.b16 %v428, %v424
    %v501 = vpack.c.b16 %v429, %v425
    %v502 = vpack.c.b16 %v434, %v430
    %v503 = vpack.c.b16 %v435, %v431
    %v504 = vpack.c.b16 %v436, %v432
    %v505 = vpack.c.b16 %v437, %v433
    %v506 = vpack.c.b16 %v442, %v438
    %v507 = vpack.c.b16 %v443, %v439
    %v508 = vpack.c.b16 %v444, %v440
    %v509 = vpack.c.b16 %v445, %v441
    %574 = vmatprep.subr.bf16.mxu0 %v447
    %575 = vmatpush1.bf16.msra.mxu0 %v446
    %576 = vmatprep.subr.bf16.mxu0 %v451
    %577 = vmatpush1.bf16.msra.mxu0 %v450
    %578 = vmatprep.subr.bf16.mxu0 %v455
    %579 = vmatpush1.bf16.msra.mxu0 %v454
    %580 = vmatprep.subr.bf16.mxu0 %v459
    %581 = vmatpush1.bf16.msra.mxu0 %v458
    %582 = vmatprep.subr.bf16.mxu0 %v463
    %583 = vmatpush1.bf16.msra.mxu0 %v462
    %584 = vmatprep.subr.bf16.mxu0 %v467
    %585 = vmatpush1.bf16.msra.mxu0 %v466
    %586 = vmatprep.subr.bf16.mxu0 %v471
    %587 = vmatpush1.bf16.msra.mxu0 %v470
    %588 = vmatprep.subr.bf16.mxu0 %v475
    %589 = vmatpush1.bf16.msra.mxu0 %v474
    %590 = vmatprep.subr.bf16.mxu0 %v479
    %591 = vmatpush1.bf16.msra.mxu0 %v478
    %592 = vmatprep.subr.bf16.mxu0 %v483
    %593 = vmatpush1.bf16.msra.mxu0 %v482
    %594 = vmatprep.subr.bf16.mxu0 %v487
    %595 = vmatpush1.bf16.msra.mxu0 %v486
    %596 = vmatprep.subr.bf16.mxu0 %v491
    %597 = vmatpush1.bf16.msra.mxu0 %v490
    %598 = vmatprep.subr.bf16.mxu0 %v495
    %599 = vmatpush1.bf16.msra.mxu0 %v494
    %600 = vmatprep.subr.bf16.mxu0 %v499
    %601 = vmatpush1.bf16.msra.mxu0 %v498
    %602 = vmatprep.subr.bf16.mxu0 %v503
    %603 = vmatpush1.bf16.msra.mxu0 %v502
    %604 = vmatprep.subr.bf16.mxu0 %v507
    %605 = vmatpush1.bf16.msra.mxu0 %v506
    %606 = vmatprep.mubr.bf16.mxu0 %v167
    %607 = vmatmul.mubr.bf16.gmra.mrb[0].mxu0 %v166
    %v608 = vpop.f32.mrb[0].mxu0
    %v609 = vadd.f32 %v237, %v608
    %v610 = vpop.f32.mrb[0].mxu0
    %v611 = vadd.f32 %v241, %v610
    %v612 = vpop.f32.mrb[0].mxu0
    %v613 = vpop.f32.mrb[0].mxu0
    %614 = vdwg.mxu0
    %615 = vmatprep.subr.bf16.mxu0 %v449
    %616 = vmatpush1.bf16.msra.mxu0 %v448
    %617 = vmatprep.subr.bf16.mxu0 %v453
    %618 = vmatpush1.bf16.msra.mxu0 %v452
    %619 = vmatprep.subr.bf16.mxu0 %v457
    %620 = vmatpush1.bf16.msra.mxu0 %v456
    %621 = vmatprep.subr.bf16.mxu0 %v461
    %622 = vmatpush1.bf16.msra.mxu0 %v460
    %623 = vmatprep.subr.bf16.mxu0 %v465
    %624 = vmatpush1.bf16.msra.mxu0 %v464
    %625 = vmatprep.subr.bf16.mxu0 %v469
    %626 = vmatpush1.bf16.msra.mxu0 %v468
    %627 = vmatprep.subr.bf16.mxu0 %v473
    %628 = vmatpush1.bf16.msra.mxu0 %v472
    %629 = vmatprep.subr.bf16.mxu0 %v477
    %630 = vmatpush1.bf16.msra.mxu0 %v476
    %631 = vmatprep.subr.bf16.mxu0 %v481
    %632 = vmatpush1.bf16.msra.mxu0 %v480
    %633 = vmatprep.subr.bf16.mxu0 %v485
    %634 = vmatpush1.bf16.msra.mxu0 %v484
    %635 = vmatprep.subr.bf16.mxu0 %v489
    %636 = vmatpush1.bf16.msra.mxu0 %v488
    %637 = vmatprep.subr.bf16.mxu0 %v493
    %638 = vmatpush1.bf16.msra.mxu0 %v492
    %639 = vmatprep.subr.bf16.mxu0 %v497
    %640 = vmatpush1.bf16.msra.mxu0 %v496
    %641 = vmatprep.subr.bf16.mxu0 %v501
    %642 = vmatpush1.bf16.msra.mxu0 %v500
    %643 = vmatprep.subr.bf16.mxu0 %v505
    %644 = vmatpush1.bf16.msra.mxu0 %v504
    %645 = vmatprep.subr.bf16.mxu0 %v509
    %646 = vmatpush1.bf16.msra.mxu0 %v508
    %647 = vmatprep.mubr.bf16.mxu0 %v167
    %648 = vmatmul.mubr.bf16.gmra.mrb[0].mxu0 %v166
    %v649 = vpop.f32.mrb[0].mxu0
    %v650 = vadd.f32 %v245, %v649
    %v651 = vpop.f32.mrb[0].mxu0
    %v652 = vadd.f32 %v249, %v651
    %v653 = vpop.f32.mrb[0].mxu0
    %v654 = vpop.f32.mrb[0].mxu0
    %655 = vdwg.mxu0
    %v656 = vmax.f32 %v609, 0.0
    %v657 = vmax.f32 %v611, 0.0
    %v658 = vmax.f32 %v650, 0.0
    %v659 = vmax.f32 %v652, 0.0
    %v660 = vpack.c.bf16 %v656, %v656
    %v661 = vpack.c.bf16 %v657, %v657
    %v662 = vpack.c.bf16 %v658, %v658
    %v663 = vpack.c.bf16 %v659, %v659
    %v664 = vld [vmem:[#allocation8] sm:$0xf]
    %v665 = vld [vmem:[#allocation8 + $0x4] sm:$0xf]
    %v666 = vld [vmem:[#allocation8 + $0x8] sm:$0xf]
    %v667 = vld [vmem:[#allocation8 + $0xc] sm:$0xf]
    %v668 = vld [vmem:[#allocation8 + $0x10] sm:$0xf]
    %v669 = vld [vmem:[#allocation8 + $0x14] sm:$0xf]
    %v670 = vld [vmem:[#allocation8 + $0x18] sm:$0xf]
    %v671 = vld [vmem:[#allocation8 + $0x1c] sm:$0xf]
    %v672 = vld [vmem:[#allocation8 + $0x20] sm:$0xf]
    %v673 = vld [vmem:[#allocation8 + $0x24] sm:$0xf]
    %v674 = vld [vmem:[#allocation8 + $0x28] sm:$0xf]
    %v675 = vld [vmem:[#allocation8 + $0x2c] sm:$0xf]
    %v676 = vld [vmem:[#allocation8 + $0x30] sm:$0xf]
    %v677 = vld [vmem:[#allocation8 + $0x34] sm:$0xf]
    %v678 = vld [vmem:[#allocation8 + $0x38] sm:$0xf]
    %v679 = vld [vmem:[#allocation8 + $0x3c] sm:$0xf]
    %v680 = vld [vmem:[#allocation8 + $0x40] sm:$0xf]
    %v681 = vld [vmem:[#allocation8 + $0x44] sm:$0xf]
    %v682 = vld [vmem:[#allocation8 + $0x48] sm:$0xf]
    %v683 = vld [vmem:[#allocation8 + $0x4c] sm:$0xf]
    %v684 = vld [vmem:[#allocation8 + $0x50] sm:$0xf]
    %v685 = vld [vmem:[#allocation8 + $0x54] sm:$0xf]
    %v686 = vld [vmem:[#allocation8 + $0x58] sm:$0xf]
    %v687 = vld [vmem:[#allocation8 + $0x5c] sm:$0xf]
    %v688 = vld [vmem:[#allocation8 + $0x60] sm:$0xf]
    %v689 = vld [vmem:[#allocation8 + $0x64] sm:$0xf]
    %v690 = vld [vmem:[#allocation8 + $0x68] sm:$0xf]
    %v691 = vld [vmem:[#allocation8 + $0x6c] sm:$0xf]
    %v692 = vld [vmem:[#allocation8 + $0x70] sm:$0xf]
    %v693 = vld [vmem:[#allocation8 + $0x74] sm:$0xf]
    %v694 = vld [vmem:[#allocation8 + $0x78] sm:$0xf]
    %v695 = vld [vmem:[#allocation8 + $0x7c] sm:$0xf]
    %v696 = vld [vmem:[#allocation8 + $0x80] sm:$0xf]
    %v697 = vld [vmem:[#allocation8 + $0x84] sm:$0xf]
    %v698 = vld [vmem:[#allocation8 + $0x88] sm:$0xf]
    %v699 = vld [vmem:[#allocation8 + $0x8c] sm:$0xf]
    %v700 = vld [vmem:[#allocation8 + $0x90] sm:$0xf]
    %v701 = vld [vmem:[#allocation8 + $0x94] sm:$0xf]
    %v702 = vld [vmem:[#allocation8 + $0x98] sm:$0xf]
    %v703 = vld [vmem:[#allocation8 + $0x9c] sm:$0xf]
    %v704 = vld [vmem:[#allocation8 + $0xa0] sm:$0xf]
    %v705 = vld [vmem:[#allocation8 + $0xa4] sm:$0xf]
    %v706 = vld [vmem:[#allocation8 + $0xa8] sm:$0xf]
    %v707 = vld [vmem:[#allocation8 + $0xac] sm:$0xf]
    %v708 = vld [vmem:[#allocation8 + $0xb0] sm:$0xf]
    %v709 = vld [vmem:[#allocation8 + $0xb4] sm:$0xf]
    %v710 = vld [vmem:[#allocation8 + $0xb8] sm:$0xf]
    %v711 = vld [vmem:[#allocation8 + $0xbc] sm:$0xf]
    %v712 = vld [vmem:[#allocation8 + $0xc0] sm:$0xf]
    %v713 = vld [vmem:[#allocation8 + $0xc4] sm:$0xf]
    %v714 = vld [vmem:[#allocation8 + $0xc8] sm:$0xf]
    %v715 = vld [vmem:[#allocation8 + $0xcc] sm:$0xf]
    %v716 = vld [vmem:[#allocation8 + $0xd0] sm:$0xf]
    %v717 = vld [vmem:[#allocation8 + $0xd4] sm:$0xf]
    %v718 = vld [vmem:[#allocation8 + $0xd8] sm:$0xf]
    %v719 = vld [vmem:[#allocation8 + $0xdc] sm:$0xf]
    %v720 = vld [vmem:[#allocation8 + $0xe0] sm:$0xf]
    %v721 = vld [vmem:[#allocation8 + $0xe4] sm:$0xf]
    %v722 = vld [vmem:[#allocation8 + $0xe8] sm:$0xf]
    %v723 = vld [vmem:[#allocation8 + $0xec] sm:$0xf]
    %v724 = vld [vmem:[#allocation8 + $0xf0] sm:$0xf]
    %v725 = vld [vmem:[#allocation8 + $0xf4] sm:$0xf]
    %v726 = vld [vmem:[#allocation8 + $0xf8] sm:$0xf]
    %v727 = vld [vmem:[#allocation8 + $0xfc] sm:$0xf]
    %v728 = vld [vmem:[%s6] sm:$0x1]
    %v730 = vlaneseq
    %v731 = vshrl.u32 %v730, 7
    %v732 = vsub.s32 0, %v731
    %v733 = vrot.slane %v728, %v732
    %v799 = vunpack.c.l.b16 %v664
    %v800 = vunpack.c.l.b16 %v665
    %v801 = vunpack.c.l.b16 %v666
    %v802 = vunpack.c.l.b16 %v667
    %v803 = vunpack.c.l.b16 %v668
    %v804 = vunpack.c.l.b16 %v669
    %v805 = vunpack.c.l.b16 %v670
    %v806 = vunpack.c.l.b16 %v671
    %v807 = vunpack.c.l.b16 %v672
    %v808 = vunpack.c.l.b16 %v673
    %v809 = vunpack.c.l.b16 %v674
    %v810 = vunpack.c.l.b16 %v675
    %v811 = vunpack.c.l.b16 %v676
    %v812 = vunpack.c.l.b16 %v677
    %v813 = vunpack.c.l.b16 %v678
    %v814 = vunpack.c.l.b16 %v679
    %v815 = vunpack.c.l.b16 %v680
    %v816 = vunpack.c.l.b16 %v681
    %v817 = vunpack.c.l.b16 %v682
    %v818 = vunpack.c.l.b16 %v683
    %v819 = vunpack.c.l.b16 %v684
    %v820 = vunpack.c.l.b16 %v685
    %v821 = vunpack.c.l.b16 %v686
    %v822 = vunpack.c.l.b16 %v687
    %v823 = vunpack.c.l.b16 %v688
    %v824 = vunpack.c.l.b16 %v689
    %v825 = vunpack.c.l.b16 %v690
    %v826 = vunpack.c.l.b16 %v691
    %v827 = vunpack.c.l.b16 %v692
    %v828 = vunpack.c.l.b16 %v693
    %v829 = vunpack.c.l.b16 %v694
    %v830 = vunpack.c.l.b16 %v695
    %v831 = vunpack.c.l.b16 %v696
    %v832 = vunpack.c.l.b16 %v697
    %v833 = vunpack.c.l.b16 %v698
    %v834 = vunpack.c.l.b16 %v699
    %v835 = vunpack.c.l.b16 %v700
    %v836 = vunpack.c.l.b16 %v701
    %v837 = vunpack.c.l.b16 %v702
    %v838 = vunpack.c.l.b16 %v703
    %v839 = vunpack.c.l.b16 %v704
    %v840 = vunpack.c.l.b16 %v705
    %v841 = vunpack.c.l.b16 %v706
    %v842 = vunpack.c.l.b16 %v707
    %v843 = vunpack.c.l.b16 %v708
    %v844 = vunpack.c.l.b16 %v709
    %v845 = vunpack.c.l.b16 %v710
    %v846 = vunpack.c.l.b16 %v711
    %v847 = vunpack.c.l.b16 %v712
    %v848 = vunpack.c.l.b16 %v713
    %v849 = vunpack.c.l.b16 %v714
    %v850 = vunpack.c.l.b16 %v715
    %v851 = vunpack.c.l.b16 %v716
    %v852 = vunpack.c.l.b16 %v717
    %v853 = vunpack.c.l.b16 %v718
    %v854 = vunpack.c.l.b16 %v719
    %v855 = vunpack.c.l.b16 %v720
    %v856 = vunpack.c.l.b16 %v721
    %v857 = vunpack.c.l.b16 %v722
    %v858 = vunpack.c.l.b16 %v723
    %v859 = vunpack.c.l.b16 %v724
    %v860 = vunpack.c.l.b16 %v725
    %v861 = vunpack.c.l.b16 %v726
    %v862 = vunpack.c.l.b16 %v727
    %v863 = vpack.c.b16 %v800, %v799
    %v864 = vpack.c.b16 %v802, %v801
    %v865 = vpack.c.b16 %v804, %v803
    %v866 = vpack.c.b16 %v806, %v805
    %v867 = vpack.c.b16 %v808, %v807
    %v868 = vpack.c.b16 %v810, %v809
    %v869 = vpack.c.b16 %v812, %v811
    %v870 = vpack.c.b16 %v814, %v813
    %v871 = vpack.c.b16 %v816, %v815
    %v872 = vpack.c.b16 %v818, %v817
    %v873 = vpack.c.b16 %v820, %v819
    %v874 = vpack.c.b16 %v822, %v821
    %v875 = vpack.c.b16 %v824, %v823
    %v876 = vpack.c.b16 %v826, %v825
    %v877 = vpack.c.b16 %v828, %v827
    %v878 = vpack.c.b16 %v830, %v829
    %v879 = vpack.c.b16 %v832, %v831
    %v880 = vpack.c.b16 %v834, %v833
    %v881 = vpack.c.b16 %v836, %v835
    %v882 = vpack.c.b16 %v838, %v837
    %v883 = vpack.c.b16 %v840, %v839
    %v884 = vpack.c.b16 %v842, %v841
    %v885 = vpack.c.b16 %v844, %v843
    %v886 = vpack.c.b16 %v846, %v845
    %v887 = vpack.c.b16 %v848, %v847
    %v888 = vpack.c.b16 %v850, %v849
    %v889 = vpack.c.b16 %v852, %v851
    %v890 = vpack.c.b16 %v854, %v853
    %v891 = vpack.c.b16 %v856, %v855
    %v892 = vpack.c.b16 %v858, %v857
    %v893 = vpack.c.b16 %v860, %v859
    %v894 = vpack.c.b16 %v862, %v861
    %927 = vmatprep.subr.bf16.mxu0 0
    %928 = vmatpush1.bf16.msra.mxu0 %v863
    %929 = vmatprep.subr.bf16.mxu0 0
    %930 = vmatpush1.bf16.msra.mxu0 %v864
    %931 = vmatprep.subr.bf16.mxu0 0
    %932 = vmatpush1.bf16.msra.mxu0 %v865
    %933 = vmatprep.subr.bf16.mxu0 0
    %934 = vmatpush1.bf16.msra.mxu0 %v866
    %935 = vmatprep.subr.bf16.mxu0 0
    %936 = vmatpush1.bf16.msra.mxu0 %v867
    %937 = vmatprep.subr.bf16.mxu0 0
    %938 = vmatpush1.bf16.msra.mxu0 %v868
    %939 = vmatprep.subr.bf16.mxu0 0
    %940 = vmatpush1.bf16.msra.mxu0 %v869
    %941 = vmatprep.subr.bf16.mxu0 0
    %942 = vmatpush1.bf16.msra.mxu0 %v870
    %943 = vmatprep.subr.bf16.mxu0 0
    %944 = vmatpush1.bf16.msra.mxu0 %v871
    %945 = vmatprep.subr.bf16.mxu0 0
    %946 = vmatpush1.bf16.msra.mxu0 %v872
    %947 = vmatprep.subr.bf16.mxu0 0
    %948 = vmatpush1.bf16.msra.mxu0 %v873
    %949 = vmatprep.subr.bf16.mxu0 0
    %950 = vmatpush1.bf16.msra.mxu0 %v874
    %951 = vmatprep.subr.bf16.mxu0 0
    %952 = vmatpush1.bf16.msra.mxu0 %v875
    %953 = vmatprep.subr.bf16.mxu0 0
    %954 = vmatpush1.bf16.msra.mxu0 %v876
    %955 = vmatprep.subr.bf16.mxu0 0
    %956 = vmatpush1.bf16.msra.mxu0 %v877
    %957 = vmatprep.subr.bf16.mxu0 0
    %958 = vmatpush1.bf16.msra.mxu0 %v878
    %959 = vmatprep.mubr.bf16.mxu0 %v661
    %960 = vmatmul.mubr.bf16.gmra.mrb[0].mxu0 %v660
    %v961 = vpop.f32.mrb[0].mxu0
    %v962 = vadd.f32 %v733, %v961
    %v963 = vpop.f32.mrb[0].mxu0
    %v964 = vpop.f32.mrb[0].mxu0
    %v965 = vpop.f32.mrb[0].mxu0
    %966 = vdwg.mxu0
    %967 = vmatprep.subr.bf16.mxu0 0
    %968 = vmatpush1.bf16.msra.mxu0 %v879
    %969 = vmatprep.subr.bf16.mxu0 0
    %970 = vmatpush1.bf16.msra.mxu0 %v880
    %971 = vmatprep.subr.bf16.mxu0 0
    %972 = vmatpush1.bf16.msra.mxu0 %v881
    %973 = vmatprep.subr.bf16.mxu0 0
    %974 = vmatpush1.bf16.msra.mxu0 %v882
    %975 = vmatprep.subr.bf16.mxu0 0
    %976 = vmatpush1.bf16.msra.mxu0 %v883
    %977 = vmatprep.subr.bf16.mxu0 0
    %978 = vmatpush1.bf16.msra.mxu0 %v884
    %979 = vmatprep.subr.bf16.mxu0 0
    %980 = vmatpush1.bf16.msra.mxu0 %v885
    %981 = vmatprep.subr.bf16.mxu0 0
    %982 = vmatpush1.bf16.msra.mxu0 %v886
    %983 = vmatprep.subr.bf16.mxu0 0
    %984 = vmatpush1.bf16.msra.mxu0 %v887
    %985 = vmatprep.subr.bf16.mxu0 0
    %986 = vmatpush1.bf16.msra.mxu0 %v888
    %987 = vmatprep.subr.bf16.mxu0 0
    %988 = vmatpush1.bf16.msra.mxu0 %v889
    %989 = vmatprep.subr.bf16.mxu0 0
    %990 = vmatpush1.bf16.msra.mxu0 %v890
    %991 = vmatprep.subr.bf16.mxu0 0
    %992 = vmatpush1.bf16.msra.mxu0 %v891
    %993 = vmatprep.subr.bf16.mxu0 0
    %994 = vmatpush1.bf16.msra.mxu0 %v892
    %995 = vmatprep.subr.bf16.mxu0 0
    %996 = vmatpush1.bf16.msra.mxu0 %v893
    %997 = vmatprep.subr.bf16.mxu0 0
    %998 = vmatpush1.bf16.msra.mxu0 %v894
    %999 = vmatprep.mubr.bf16.mxu0 %v663
    %1000 = vmatmul.mubr.bf16.gmra.mrb[0].mxu0 %v662
    %v1001 = vpop.f32.mrb[0].mxu0
    %v1002 = vadd.f32 %v962, %v1001
    %v1003 = vpop.f32.mrb[0].mxu0
    %v1004 = vpop.f32.mrb[0].mxu0
    %v1005 = vpop.f32.mrb[0].mxu0
    %1006 = vdwg.mxu0
    %v1007 = vtanh.pop %v1002
    %1008 = vst [vmem:[#allocation10] sm:$0xff] %v1007
    // Predicated region
    $region46: #{tpu_custom_call.1} parent=1 // pred_check
      _
    $region47: #{tpu_custom_call.1} parent=1 // pred_check_branch
      %1010 = sbr.rel (0) target = $region49
    $region48: #{tpu_custom_call.1} parent=1 // pred_region
      %s1012 = ssub.s32 128, 128
      %1013 = vsyncadd [#allocation4], %s1012
      %s1015 = sshll.u32 [#allocation10], 4
      %s1016 = int_to_ptr.vmem [resolvable:$true] %s1015
      %1018 = dma.vmem_to_hbm [thread:$0]  %s1016, 128, %s7, [#allocation4]
    $region49: #{tpu_custom_call.1} parent=1 // pred_fallthru
      _
    // Predicated region
    $region50: #{tpu_custom_call.1} parent=1 // pred_check
      _
    $region51: #{tpu_custom_call.1} parent=1 // pred_check_branch
      %1020 = sbr.rel (0) target = $region53
    $region52: #{tpu_custom_call.1} parent=1 // pred_region
      %1021 = dma.done [#allocation4], 128
    $region53: #{tpu_custom_call.1} parent=1 // pred_fallthru
      _
    %1022 = vsyncpa [#allocation3], 1
    %1023 = vsyncpa [#allocation6], 1
    %1024 = vsyncpa [#allocation9], 1
    %1025 = vsyncpa [#allocation4], 1

</llo_original>
